<compile_context>
chip_gen: v5e
topology: v5e:2x2
jax: 0.10.0
libtpu: 0.0.40
codegen_flags: <defaults>
</compile_context>

<pallas_src>
import math

import jax
import jax.numpy as jnp
from jax import lax
from jax.experimental import pallas as pl
from jax.experimental.pallas import tpu as pltpu

LANE = 128                      # TPU lane width
HALF = 64                       # lane offset of the log_std / log_prob half
EPS_COLS = 8                    # eps is passed as (B, 8); only cols 0-1 are used
_HALF_LOG_2PI = 0.5 * math.log(2.0 * math.pi)


def _softplus(x):
    # Numerically stable softplus (matches F.softplus, beta=1).
    return jnp.maximum(x, 0.0) + jnp.log1p(jnp.exp(-jnp.abs(x)))


def _sigmoid(x):
    return 1.0 / (1.0 + jnp.exp(-x))


def _round_up(n, m):
    return ((n + m - 1) // m) * m


# --------------------------------------------------------------------------- #
# Kernel
# --------------------------------------------------------------------------- #
def actor_linear_kernel(x_ref, eps_ref,
                        w1_ref, b1_ref,
                        w2_ref, b2_ref,
                        w3_ref, b3_ref,
                        wh_ref, bh_ref,
                        out_ref):
    """Fused Actor_Linear forward for one batch tile.

    x_ref:   (TB, state_dim) f32
    eps_ref: (TB, 8)         f32 N(0,1) noise, only cols 0-1 used
    w*:      bf16 lane-dense padded weights; b*: f32 biases
    out_ref: (TB, 128) f32 fused slab: action in lanes 0-1, log_prob in 64-65
    """
    bf16 = jnp.bfloat16
    f32 = jnp.float32

    # ---- three hidden Linear + ReLU layers: bf16 MXU, f32 accumulation ----
    h = jnp.dot(x_ref[...].astype(bf16), w1_ref[...],
                preferred_element_type=f32) + b1_ref[...]
    h = jnp.maximum(h, 0.0).astype(bf16)
    h = jnp.dot(h, w2_ref[...], preferred_element_type=f32) + b2_ref[...]
    h = jnp.maximum(h, 0.0).astype(bf16)
    h = jnp.dot(h, w3_ref[...], preferred_element_type=f32) + b3_ref[...]
    h = jnp.maximum(h, 0.0).astype(bf16)                      # (TB,128), lanes>=64 are 0

    # ---- fused head: lanes 0-1 = mean, lanes 64-65 = log_std (rest exactly 0) ----
    head = jnp.dot(h, wh_ref[...], preferred_element_type=f32) + bh_ref[...]

    # ---- lift -0.5*eps^2 (cols 0..7) into lanes 64..71 via a tiny selector matmul ----
    eps = eps_ref[...]                                        # (TB, 8)
    neg_half_eps_sq = (-0.5) * eps * eps
    row = lax.broadcasted_iota(jnp.int32, (EPS_COLS, LANE), 0)
    lane = lax.broadcasted_iota(jnp.int32, (EPS_COLS, LANE), 1)
    sel = (lane == row + HALF).astype(f32)                    # (8,128) one-hot
    eps_term = jnp.dot(neg_half_eps_sq, sel, preferred_element_type=f32)  # (TB,128)

    col = lax.broadcasted_iota(jnp.int32, head.shape, 1)

    # ---- action half (lanes 0-1): tanh(mean0) / sigmoid(mean1) from ONE tanh pass ----
    t = jnp.tanh(jnp.where(col == 1, 0.5 * head, head))
    action_raw = jnp.where(col == 0, t, 0.5 * (t + 1.0))      # lane0 tanh, lane1 sigmoid
    action = action_raw * jnp.where(col == 0, 2.5, 0.22)

    # ---- log_prob half (lanes 64-65) ----
    std = _softplus(head)                                     # lanes 64-65 = softplus(log_std)
    ta = jnp.tanh(pltpu.roll(action_raw, shift=HALF, axis=1)) # action_raw now in lanes 64-65
    log_prob = (eps_term - jnp.log(std) - _HALF_LOG_2PI
                - jnp.log(1.0 - ta * ta + 1e-7))

    # ---- single fused output slab: lanes <64 action, lanes >=64 log_prob ----
    out_ref[...] = jnp.where(col < HALF, action, log_prob).astype(out_ref.dtype)


# --------------------------------------------------------------------------- #
# Parameter packing (pad narrow dims to 128 lanes, fuse mean/std heads, bf16)
# --------------------------------------------------------------------------- #
def pack_actor_params(raw_params, action_dim):
    (w1, b1), (w2, b2), (w3, b3), (wm, bm), (ws, bs) = raw_params
    hid3 = w3.shape[1]                                        # 64

    # hidden dim 64 -> 128 with zero columns (ReLU keeps the padding at 0)
    w3p = jnp.zeros((w3.shape[0], LANE), jnp.float32).at[:, :hid3].set(w3)
    b3p = jnp.zeros((1, LANE), jnp.float32).at[:, :hid3].set(b3.reshape(1, -1))

    # fused head (128,128): lanes [0:ad] = mean weights, [64:64+ad] = std weights
    wh = jnp.zeros((LANE, LANE), jnp.float32)
    wh = wh.at[:hid3, :action_dim].set(wm)
    wh = wh.at[:hid3, HALF:HALF + action_dim].set(ws)
    bh = jnp.zeros((1, LANE), jnp.float32)
    bh = bh.at[:, :action_dim].set(bm.reshape(1, -1))
    bh = bh.at[:, HALF:HALF + action_dim].set(bs.reshape(1, -1))

    bf16 = jnp.bfloat16
    return (w1.astype(bf16), b1.reshape(1, -1),
            w2.astype(bf16), b2.reshape(1, -1),
            w3p.astype(bf16), b3p,
            wh.astype(bf16), bh)


# --------------------------------------------------------------------------- #
# Wrapper
# --------------------------------------------------------------------------- #
def actor_linear_forward(x, eps, packed, action_dim, *, block_b=1024):
    """x: (B, state_dim), eps: (B, 8) ~ N(0,1) (cols 0-1 used).

    Returns (action (B,2), log_prob (B,2)).
    block_b: batch-tile cap; 1024 default (fits v7x 64 MiB VMEM), 2048 is fine
    on v5e/v6e's 128 MiB.
    """
    assert action_dim == 2, "Actor_Linear's action/log_prob math requires action_dim == 2"
    w1, b1, w2, b2, w3p, b3p, wh, bh = packed
    batch, state_dim = x.shape
    assert eps.shape == (batch, EPS_COLS)

    # >=2 batch tiles whenever possible so both v7x TensorCores get work,
    # capped at block_b so per-tile intermediates stay well inside VMEM.
    tb = min(block_b, max(8, _round_up(pl.cdiv(batch, 2), 8)))
    grid = (pl.cdiv(batch, tb),)

    def resident(arr):
        # Weights/biases: full-array block reused by every batch tile (DMA'd once).
        return pl.BlockSpec(arr.shape, lambda i: (0, 0))

    flops = 2 * batch * (state_dim * 512 + 512 * 256 + 256 * LANE
                         + LANE * LANE + EPS_COLS * LANE)
    bytes_accessed = (4 * x.size + 4 * eps.size + 4 * batch * LANE
                      + sum(int(a.size) * a.dtype.itemsize for a in packed))
    cost = pl.CostEstimate(flops=int(flops),
                           transcendentals=int(6 * batch * LANE),
                           bytes_accessed=int(bytes_accessed))

    out = pl.pallas_call(
        actor_linear_kernel,
        out_shape=jax.ShapeDtypeStruct((batch, LANE), jnp.float32),
        grid=grid,
        in_specs=[
            pl.BlockSpec((tb, state_dim), lambda i: (i, 0)),   # x tile
            pl.BlockSpec((tb, EPS_COLS), lambda i: (i, 0)),    # eps tile (narrow)
            resident(w1), resident(b1),
            resident(w2), resident(b2),
            resident(w3p), resident(b3p),
            resident(wh), resident(bh),
        ],
        out_specs=pl.BlockSpec((tb, LANE), lambda i: (i, 0)),
        compiler_params=pltpu.CompilerParams(
            dimension_semantics=("parallel",),
            vmem_limit_bytes=32 * 1024 * 1024),                # covers tb <= 2048
        cost_estimate=cost,
    )(x, eps, w1, b1, w2, b2, w3p, b3p, wh, bh)

    return out[:, :action_dim], out[:, HALF:HALF + action_dim]


# --------------------------------------------------------------------------- #
# Init + pure-JAX reference
# --------------------------------------------------------------------------- #
def xavier_uniform(key, fan_in, fan_out):
    bound = math.sqrt(6.0 / (fan_in + fan_out))               # torch xavier_uniform_, gain=1
    return jax.random.uniform(key, (fan_in, fan_out), jnp.float32, -bound, bound)


def init_actor_params(key, state_dim, action_dim):
    dims = [(state_dim, 512), (512, 256), (256, 64),
            (64, action_dim), (64, action_dim)]                # h1, h2, h3, mean, std
    keys = jax.random.split(key, len(dims))
    return [(xavier_uniform(k, fi, fo), jnp.zeros((fo,), jnp.float32))
            for k, (fi, fo) in zip(keys, dims)]


def reference_forward(x, eps, raw_params):
    (w1, b1), (w2, b2), (w3, b3), (wm, bm), (ws, bs) = raw_params
    h = jnp.maximum(x @ w1 + b1, 0.0)
    h = jnp.maximum(h @ w2 + b2, 0.0)
    h = jnp.maximum(h @ w3 + b3, 0.0)
    mean = h @ wm + bm
    log_std = h @ ws + bs
    std = _softplus(log_std)
    sample = mean + std * eps
    z = (sample - mean) / std
    log_prob_ = -0.5 * z * z - jnp.log(std) - _HALF_LOG_2PI
    action_raw = jnp.stack([jnp.tanh(mean[:, 0]), _sigmoid(mean[:, 1])], axis=1)
    log_prob = log_prob_ - jnp.log(1.0 - jnp.tanh(action_raw) ** 2 + 1e-7)
    action = jnp.stack([jnp.tanh(mean[:, 0]) * 2.5, _sigmoid(mean[:, 1]) * 0.22], axis=1)
    return action, log_prob


if __name__ == "__main__":
    state_dim, action_dim, batch = 24, 2, 8

    key = jax.random.PRNGKey(0)
    kp, kx, ke = jax.random.split(key, 3)
    raw_params = init_actor_params(kp, state_dim, action_dim)
    packed = pack_actor_params(raw_params, action_dim)

    x = jax.random.normal(kx, (batch, state_dim), jnp.float32)
    eps = jax.random.normal(ke, (batch, EPS_COLS), jnp.float32)   # rsample() noise

    action, log_prob = actor_linear_forward(x, eps, packed, action_dim)
    action = jax.block_until_ready(action)
    log_prob = jax.block_until_ready(log_prob)

    ref_action, ref_log_prob = reference_forward(x, eps[:, :action_dim], raw_params)

    assert action.shape == (batch, action_dim)
    assert log_prob.shape == (batch, action_dim)
    # Kernel runs the matmuls in bf16 (f32 accumulation), so compare at a
    # bf16-level tolerance against the pure-f32 reference.
    assert jnp.allclose(action, ref_action, atol=2e-2, rtol=2e-2)
    assert jnp.allclose(log_prob, ref_log_prob, atol=2e-2, rtol=2e-2)
    assert bool(jnp.all(jnp.isfinite(action))) and bool(jnp.all(jnp.isfinite(log_prob)))

    print("KERNEL_OK")
</pallas_src>

<mosaic_0001>
module attributes {stable_mosaic.version = 11 : i64} {
  func.func @actor_linear_kernel(%arg0: i32, %arg1: memref<8x24xf32, #tpu.memory_space<vmem>>, %arg2: memref<8x8xf32, #tpu.memory_space<vmem>>, %arg3: memref<24x512xbf16, #tpu.memory_space<vmem>>, %arg4: memref<1x512xf32, #tpu.memory_space<vmem>>, %arg5: memref<512x256xbf16, #tpu.memory_space<vmem>>, %arg6: memref<1x256xf32, #tpu.memory_space<vmem>>, %arg7: memref<256x128xbf16, #tpu.memory_space<vmem>>, %arg8: memref<1x128xf32, #tpu.memory_space<vmem>>, %arg9: memref<128x128xbf16, #tpu.memory_space<vmem>>, %arg10: memref<1x128xf32, #tpu.memory_space<vmem>>, %arg11: memref<8x128xf32, #tpu.memory_space<vmem>>) attributes {dimension_semantics = [#tpu.dimension_semantics<parallel>], iteration_bounds = array<i64: 1>, scalar_prefetch = 0 : i64, scratch_operands = 0 : i64, tpu.core_type = #tpu.core_type<tc>, window_params = [{transform_indices = @transform_0, window_bounds = array<i64: 8, 24>}, {transform_indices = @transform_1, window_bounds = array<i64: 8, 8>}, {pipeline_mode = #tpu.pipeline_mode<synchronous>, transform_indices = @transform_2, window_bounds = array<i64: 24, 512>}, {pipeline_mode = #tpu.pipeline_mode<synchronous>, transform_indices = @transform_3, window_bounds = array<i64: 1, 512>}, {pipeline_mode = #tpu.pipeline_mode<synchronous>, transform_indices = @transform_4, window_bounds = array<i64: 512, 256>}, {pipeline_mode = #tpu.pipeline_mode<synchronous>, transform_indices = @transform_5, window_bounds = array<i64: 1, 256>}, {pipeline_mode = #tpu.pipeline_mode<synchronous>, transform_indices = @transform_6, window_bounds = array<i64: 256, 128>}, {pipeline_mode = #tpu.pipeline_mode<synchronous>, transform_indices = @transform_7, window_bounds = array<i64: 1, 128>}, {pipeline_mode = #tpu.pipeline_mode<synchronous>, transform_indices = @transform_8, window_bounds = array<i64: 128, 128>}, {pipeline_mode = #tpu.pipeline_mode<synchronous>, transform_indices = @transform_9, window_bounds = array<i64: 1, 128>}, {transform_indices = @transform_10, window_bounds = array<i64: 8, 128>}]} {
    %c0 = arith.constant 0 : index
    %c0_0 = arith.constant 0 : index
    %0 = vector.load %arg1[%c0, %c0_0] : memref<8x24xf32, #tpu.memory_space<vmem>>, vector<8x24xf32>
    %1 = arith.truncf %0 : vector<8x24xf32> to vector<8x24xbf16>
    %c0_1 = arith.constant 0 : index
    %c0_2 = arith.constant 0 : index
    %2 = vector.load %arg3[%c0_1, %c0_2] : memref<24x512xbf16, #tpu.memory_space<vmem>>, vector<24x512xbf16>
    %cst = arith.constant dense<0.000000e+00> : vector<8x512xf32>
    %3 = tpu.matmul %1, %2, %cst {dimension_numbers = #tpu.dot_dimension_numbers<[1], [0], [0], [1], [0, 0, 1, 1], [], []>} : vector<8x24xbf16>, vector<24x512xbf16>, vector<8x512xf32> -> vector<8x512xf32>
    %c0_3 = arith.constant 0 : index
    %c0_4 = arith.constant 0 : index
    %4 = vector.load %arg4[%c0_3, %c0_4] : memref<1x512xf32, #tpu.memory_space<vmem>>, vector<1x512xf32>
    %5 = vector.broadcast %4 : vector<1x512xf32> to vector<8x512xf32>
    %6 = arith.addf %3, %5 : vector<8x512xf32>
    %cst_5 = arith.constant 0.000000e+00 : f32
    %7 = vector.broadcast %cst_5 : f32 to vector<8x512xf32>
    %8 = arith.maximumf %6, %7 : vector<8x512xf32>
    %9 = arith.truncf %8 : vector<8x512xf32> to vector<8x512xbf16>
    %c0_6 = arith.constant 0 : index
    %c0_7 = arith.constant 0 : index
    %10 = vector.load %arg5[%c0_6, %c0_7] : memref<512x256xbf16, #tpu.memory_space<vmem>>, vector<512x256xbf16>
    %cst_8 = arith.constant dense<0.000000e+00> : vector<8x256xf32>
    %11 = tpu.matmul %9, %10, %cst_8 {dimension_numbers = #tpu.dot_dimension_numbers<[1], [0], [0], [1], [0, 0, 1, 1], [], []>} : vector<8x512xbf16>, vector<512x256xbf16>, vector<8x256xf32> -> vector<8x256xf32>
    %c0_9 = arith.constant 0 : index
    %c0_10 = arith.constant 0 : index
    %12 = vector.load %arg6[%c0_9, %c0_10] : memref<1x256xf32, #tpu.memory_space<vmem>>, vector<1x256xf32>
    %13 = vector.broadcast %12 : vector<1x256xf32> to vector<8x256xf32>
    %14 = arith.addf %11, %13 : vector<8x256xf32>
    %cst_11 = arith.constant 0.000000e+00 : f32
    %15 = vector.broadcast %cst_11 : f32 to vector<8x256xf32>
    %16 = arith.maximumf %14, %15 : vector<8x256xf32>
    %17 = arith.truncf %16 : vector<8x256xf32> to vector<8x256xbf16>
    %c0_12 = arith.constant 0 : index
    %c0_13 = arith.constant 0 : index
    %18 = vector.load %arg7[%c0_12, %c0_13] : memref<256x128xbf16, #tpu.memory_space<vmem>>, vector<256x128xbf16>
    %cst_14 = arith.constant dense<0.000000e+00> : vector<8x128xf32>
    %19 = tpu.matmul %17, %18, %cst_14 {dimension_numbers = #tpu.dot_dimension_numbers<[1], [0], [0], [1], [0, 0, 1, 1], [], []>} : vector<8x256xbf16>, vector<256x128xbf16>, vector<8x128xf32> -> vector<8x128xf32>
    %c0_15 = arith.constant 0 : index
    %c0_16 = arith.constant 0 : index
    %20 = vector.load %arg8[%c0_15, %c0_16] : memref<1x128xf32, #tpu.memory_space<vmem>>, vector<1x128xf32>
    %21 = vector.broadcast %20 : vector<1x128xf32> to vector<8x128xf32>
    %22 = arith.addf %19, %21 : vector<8x128xf32>
    %cst_17 = arith.constant 0.000000e+00 : f32
    %23 = vector.broadcast %cst_17 : f32 to vector<8x128xf32>
    %24 = arith.maximumf %22, %23 : vector<8x128xf32>
    %25 = arith.truncf %24 : vector<8x128xf32> to vector<8x128xbf16>
    %c0_18 = arith.constant 0 : index
    %c0_19 = arith.constant 0 : index
    %26 = vector.load %arg9[%c0_18, %c0_19] : memref<128x128xbf16, #tpu.memory_space<vmem>>, vector<128x128xbf16>
    %cst_20 = arith.constant dense<0.000000e+00> : vector<8x128xf32>
    %27 = tpu.matmul %25, %26, %cst_20 {dimension_numbers = #tpu.dot_dimension_numbers<[1], [0], [0], [1], [0, 0, 1, 1], [], []>} : vector<8x128xbf16>, vector<128x128xbf16>, vector<8x128xf32> -> vector<8x128xf32>
    %c0_21 = arith.constant 0 : index
    %c0_22 = arith.constant 0 : index
    %28 = vector.load %arg10[%c0_21, %c0_22] : memref<1x128xf32, #tpu.memory_space<vmem>>, vector<1x128xf32>
    %29 = vector.broadcast %28 : vector<1x128xf32> to vector<8x128xf32>
    %30 = arith.addf %27, %29 : vector<8x128xf32>
    %c0_23 = arith.constant 0 : index
    %c0_24 = arith.constant 0 : index
    %31 = vector.load %arg2[%c0_23, %c0_24] : memref<8x8xf32, #tpu.memory_space<vmem>>, vector<8x8xf32>
    %cst_25 = arith.constant -5.000000e-01 : f32
    %32 = vector.broadcast %cst_25 : f32 to vector<8x8xf32>
    %33 = arith.mulf %32, %31 : vector<8x8xf32>
    %34 = arith.mulf %33, %31 : vector<8x8xf32>
    %35 = tpu.iota {dimensions = array<i32: 0>} : vector<8x128xi32>
    %36 = tpu.iota {dimensions = array<i32: 1>} : vector<8x128xi32>
    %c64_i32 = arith.constant 64 : i32
    %37 = vector.broadcast %c64_i32 : i32 to vector<8x128xi32>
    %38 = arith.addi %35, %37 : vector<8x128xi32>
    %39 = arith.cmpi eq, %36, %38 : vector<8x128xi32>
    %40 = arith.extui %39 : vector<8x128xi1> to vector<8x128xi32>
    %41 = arith.sitofp %40 : vector<8x128xi32> to vector<8x128xf32>
    %cst_26 = arith.constant dense<0.000000e+00> : vector<8x128xf32>
    %42 = tpu.matmul %34, %41, %cst_26 {dimension_numbers = #tpu.dot_dimension_numbers<[1], [0], [0], [1], [0, 0, 1, 1], [], []>} : vector<8x8xf32>, vector<8x128xf32>, vector<8x128xf32> -> vector<8x128xf32>
    %43 = tpu.iota {dimensions = array<i32: 1>} : vector<8x128xi32>
    %c1_i32 = arith.constant 1 : i32
    %44 = vector.broadcast %c1_i32 : i32 to vector<8x128xi32>
    %45 = arith.cmpi eq, %43, %44 : vector<8x128xi32>
    %cst_27 = arith.constant 5.000000e-01 : f32
    %46 = vector.broadcast %cst_27 : f32 to vector<8x128xf32>
    %47 = arith.mulf %46, %30 : vector<8x128xf32>
    %48 = arith.select %45, %47, %30 : vector<8x128xi1>, vector<8x128xf32>
    %49 = math.tanh %48 : vector<8x128xf32>
    %c0_i32 = arith.constant 0 : i32
    %50 = vector.broadcast %c0_i32 : i32 to vector<8x128xi32>
    %51 = arith.cmpi eq, %43, %50 : vector<8x128xi32>
    %cst_28 = arith.constant 1.000000e+00 : f32
    %52 = vector.broadcast %cst_28 : f32 to vector<8x128xf32>
    %53 = arith.addf %49, %52 : vector<8x128xf32>
    %cst_29 = arith.constant 5.000000e-01 : f32
    %54 = vector.broadcast %cst_29 : f32 to vector<8x128xf32>
    %55 = arith.mulf %54, %53 : vector<8x128xf32>
    %56 = arith.select %51, %49, %55 : vector<8x128xi1>, vector<8x128xf32>
    %c0_i32_30 = arith.constant 0 : i32
    %57 = vector.broadcast %c0_i32_30 : i32 to vector<8x128xi32>
    %58 = arith.cmpi eq, %43, %57 : vector<8x128xi32>
    %cst_31 = arith.constant 2.500000e+00 : f32
    %cst_32 = arith.constant 2.200000e-01 : f32
    %59 = vector.broadcast %cst_31 : f32 to vector<8x128xf32>
    %60 = vector.broadcast %cst_32 : f32 to vector<8x128xf32>
    %61 = arith.select %58, %59, %60 : vector<8x128xi1>, vector<8x128xf32>
    %62 = arith.mulf %56, %61 : vector<8x128xf32>
    %cst_33 = arith.constant 0.000000e+00 : f32
    %63 = vector.broadcast %cst_33 : f32 to vector<8x128xf32>
    %64 = arith.maximumf %30, %63 : vector<8x128xf32>
    %65 = math.absf %30 : vector<8x128xf32>
    %cst_34 = arith.constant 0.000000e+00 : f32
    %66 = vector.broadcast %cst_34 : f32 to vector<8x128xf32>
    %67 = arith.subf %66, %65 : vector<8x128xf32>
    %68 = math.exp %67 : vector<8x128xf32>
    %69 = math.log1p %68 : vector<8x128xf32>
    %70 = arith.addf %64, %69 : vector<8x128xf32>
    %c64_i32_35 = arith.constant 64 : i32
    %71 = tpu.dynamic_rotate %56 by %c64_i32_35 dim 1 : vector<8x128xf32>, i32 -> vector<8x128xf32>
    %72 = math.tanh %71 : vector<8x128xf32>
    %73 = math.log %70 : vector<8x128xf32>
    %74 = arith.subf %42, %73 : vector<8x128xf32>
    %cst_36 = arith.constant 0.918938517 : f32
    %75 = vector.broadcast %cst_36 : f32 to vector<8x128xf32>
    %76 = arith.subf %74, %75 : vector<8x128xf32>
    %77 = arith.mulf %72, %72 : vector<8x128xf32>
    %cst_37 = arith.constant 1.000000e+00 : f32
    %78 = vector.broadcast %cst_37 : f32 to vector<8x128xf32>
    %79 = arith.subf %78, %77 : vector<8x128xf32>
    %cst_38 = arith.constant 1.000000e-07 : f32
    %80 = vector.broadcast %cst_38 : f32 to vector<8x128xf32>
    %81 = arith.addf %79, %80 : vector<8x128xf32>
    %82 = math.log %81 : vector<8x128xf32>
    %83 = arith.subf %76, %82 : vector<8x128xf32>
    %c64_i32_39 = arith.constant 64 : i32
    %84 = vector.broadcast %c64_i32_39 : i32 to vector<8x128xi32>
    %85 = arith.cmpi slt, %43, %84 : vector<8x128xi32>
    %86 = arith.select %85, %62, %83 : vector<8x128xi1>, vector<8x128xf32>
    %c0_40 = arith.constant 0 : index
    %c0_41 = arith.constant 0 : index
    %87 = vector.load %arg11[%c0_40, %c0_41] : memref<8x128xf32, #tpu.memory_space<vmem>>, vector<8x128xf32>
    tpu.vector_store %arg11[%c0_40, %c0_41], %86 {strides = array<i32>} : memref<8x128xf32, #tpu.memory_space<vmem>>, vector<8x128xf32>,
    return
  }
  func.func @transform_0(%arg0: i32) -> (i32, i32) {
    %c0_i32 = arith.constant 0 : i32
    %c0_i32_0 = arith.constant 0 : i32
    return %arg0, %c0_i32 : i32, i32
  }
  func.func @transform_1(%arg0: i32) -> (i32, i32) {
    %c0_i32 = arith.constant 0 : i32
    %c0_i32_0 = arith.constant 0 : i32
    return %arg0, %c0_i32 : i32, i32
  }
  func.func @transform_2(%arg0: i32) -> (i32, i32) {
    %c0_i32 = arith.constant 0 : i32
    %c0_i32_0 = arith.constant 0 : i32
    %c0_i32_1 = arith.constant 0 : i32
    return %c0_i32, %c0_i32_0 : i32, i32
  }
  func.func @transform_3(%arg0: i32) -> (i32, i32) {
    %c0_i32 = arith.constant 0 : i32
    %c0_i32_0 = arith.constant 0 : i32
    %c0_i32_1 = arith.constant 0 : i32
    return %c0_i32, %c0_i32_0 : i32, i32
  }
  func.func @transform_4(%arg0: i32) -> (i32, i32) {
    %c0_i32 = arith.constant 0 : i32
    %c0_i32_0 = arith.constant 0 : i32
    %c0_i32_1 = arith.constant 0 : i32
    return %c0_i32, %c0_i32_0 : i32, i32
  }
  func.func @transform_5(%arg0: i32) -> (i32, i32) {
    %c0_i32 = arith.constant 0 : i32
    %c0_i32_0 = arith.constant 0 : i32
    %c0_i32_1 = arith.constant 0 : i32
    return %c0_i32, %c0_i32_0 : i32, i32
  }
  func.func @transform_6(%arg0: i32) -> (i32, i32) {
    %c0_i32 = arith.constant 0 : i32
    %c0_i32_0 = arith.constant 0 : i32
    %c0_i32_1 = arith.constant 0 : i32
    return %c0_i32, %c0_i32_0 : i32, i32
  }
  func.func @transform_7(%arg0: i32) -> (i32, i32) {
    %c0_i32 = arith.constant 0 : i32
    %c0_i32_0 = arith.constant 0 : i32
    %c0_i32_1 = arith.constant 0 : i32
    return %c0_i32, %c0_i32_0 : i32, i32
  }
  func.func @transform_8(%arg0: i32) -> (i32, i32) {
    %c0_i32 = arith.constant 0 : i32
    %c0_i32_0 = arith.constant 0 : i32
    %c0_i32_1 = arith.constant 0 : i32
    return %c0_i32, %c0_i32_0 : i32, i32
  }
  func.func @transform_9(%arg0: i32) -> (i32, i32) {
    %c0_i32 = arith.constant 0 : i32
    %c0_i32_0 = arith.constant 0 : i32
    %c0_i32_1 = arith.constant 0 : i32
    return %c0_i32, %c0_i32_0 : i32, i32
  }
  func.func @transform_10(%arg0: i32) -> (i32, i32) {
    %c0_i32 = arith.constant 0 : i32
    %c0_i32_0 = arith.constant 0 : i32
    return %arg0, %c0_i32 : i32, i32
  }
}

</mosaic_0001>

<llo_original>
// kernel: tpu_custom_call.1
$region0: #{tpu_custom_call.1}
  #allocation0 [shape = 'u32[]', space=smem, size = 0x4, offset = 0x4, fixed_abs, tag = 'smem constant byte address 0x4 - core index']
  #allocation1 [shape = 'u32[72,128]{1,0:T(1,128)}', space=vmem, size = 0x9000, scoped, tag = 'internal scratch']
  %s0 = inlined_call_operand.hbm [shape: f32[8,24], index: 0, kind: input, shape index: {}]
  %s1 = inlined_call_operand.hbm [shape: f32[8,8], index: 1, kind: input, shape index: {}]
  %s2 = inlined_call_operand.hbm [shape: bf16[24,512], index: 2, kind: input, shape index: {}]
  %s3 = inlined_call_operand.hbm [shape: f32[1,512], index: 3, kind: input, shape index: {}]
  %s4 = inlined_call_operand.hbm [shape: bf16[512,256], index: 4, kind: input, shape index: {}]
  %s5 = inlined_call_operand.vmem [shape: f32[1,256], index: 5, kind: input, shape index: {}]
  %s6 = inlined_call_operand.hbm [shape: bf16[256,128], index: 6, kind: input, shape index: {}]
  %s7 = inlined_call_operand.vmem [shape: f32[1,128], index: 7, kind: input, shape index: {}]
  %s8 = inlined_call_operand.hbm [shape: bf16[128,128], index: 8, kind: input, shape index: {}]
  %s9 = inlined_call_operand.vmem [shape: f32[1,128], index: 9, kind: input, shape index: {}]
  %s10 = inlined_call_operand.hbm [shape: f32[8,128], index: 10, kind: output, shape index: {}]
  %s11 = sld [smem:[#allocation0]]
  $region78: #{tpu_custom_call.1} parent=0
    _
  %s13 = ssub.s32 1, %s11
  %s14 = scalar_select 0, %s13, %s11
  $region1: #{tpu_custom_call.1} parent=0
    #allocation2 [shape = 'u8[4096]{0}', space=vmem, size = 0x1000, scoped, tag = 'input window, operand 0, single buffered']
    #allocation3 [shape = 's32[1]{0}', space=sflag, size = 0x4, scoped, tag = 'scoped memory for tpu_custom_call.1']
    #allocation4 [shape = 's32[1]{0}', space=sflag, size = 0x4, scoped, tag = 'scoped memory for tpu_custom_call.1']
    #allocation5 [shape = 'u8[4096]{0}', space=vmem, size = 0x1000, scoped, tag = 'input window, operand 1, single buffered']
    #allocation6 [shape = 's32[1]{0}', space=sflag, size = 0x4, scoped, tag = 'scoped memory for tpu_custom_call.1']
    #allocation7 [shape = 'u8[24576]{0}', space=vmem, size = 0x6000, scoped, tag = 'input window, operand 2, single buffered']
    #allocation8 [shape = 'u8[2048]{0}', space=vmem, size = 0x800, scoped, tag = 'input window, operand 3, single buffered']
    #allocation9 [shape = 's32[1]{0}', space=sflag, size = 0x4, scoped, tag = 'scoped memory for tpu_custom_call.1']
    #allocation10 [shape = 'u8[262144]{0}', space=vmem, size = 0x40000, scoped, tag = 'input window, operand 4, single buffered']
    #allocation11 [shape = 'u8[65536]{0}', space=vmem, size = 0x10000, scoped, tag = 'input window, operand 6, single buffered']
    #allocation12 [shape = 's32[1]{0}', space=sflag, size = 0x4, scoped, tag = 'scoped memory for tpu_custom_call.1']
    #allocation13 [shape = 'u8[32768]{0}', space=vmem, size = 0x8000, scoped, tag = 'input window, operand 8, single buffered']
    #allocation14 [shape = 'u8[4096]{0}', space=vmem, size = 0x1000, scoped, tag = 'output window, operand 0, single buffered']
    %15 = vsyncpa [#allocation3], 0
    %16 = vsyncpa [#allocation6], 0
    %17 = vsyncpa [#allocation9], 0
    %18 = vsyncpa [#allocation12], 0
    %19 = vsyncpa [#allocation4], 0
    // Predicated region
    $region2: #{tpu_custom_call.1} parent=1 // pred_check
      _
    $region3: #{tpu_custom_call.1} parent=1 // pred_check_branch
      %21 = sbr.rel (0) target = $region5
    $region4: #{tpu_custom_call.1} parent=1 // pred_region
      %23 = vsyncadd [#allocation3], 0
      %s25 = sshll.u32 %s0, 4
      %s26 = int_to_ptr.hbm [resolvable:$true] %s25
      %s27 = sshll.u32 [#allocation2], 4
      %s28 = int_to_ptr.vmem [resolvable:$true] %s27
      %30 = dma.hbm_to_vmem [thread:$0]  %s26, 128, %s28, [#allocation3]
    $region5: #{tpu_custom_call.1} parent=1 // pred_fallthru
      _
    // Predicated region
    $region6: #{tpu_custom_call.1} parent=1 // pred_check
      _
    $region7: #{tpu_custom_call.1} parent=1 // pred_check_branch
      %32 = sbr.rel (0) target = $region9
    $region8: #{tpu_custom_call.1} parent=1 // pred_region
      %34 = vsyncadd [#allocation6], 0
      %s36 = sshll.u32 %s1, 4
      %s37 = int_to_ptr.hbm [resolvable:$true] %s36
      %s38 = sshll.u32 [#allocation5], 4
      %s39 = int_to_ptr.vmem [resolvable:$true] %s38
      %41 = dma.hbm_to_vmem [thread:$0]  %s37, 128, %s39, [#allocation6]
    $region9: #{tpu_custom_call.1} parent=1 // pred_fallthru
      _
    // Predicated region
    $region10: #{tpu_custom_call.1} parent=1 // pred_check
      _
    $region11: #{tpu_custom_call.1} parent=1 // pred_check_branch
      %43 = sbr.rel (0) target = $region13
    $region12: #{tpu_custom_call.1} parent=1 // pred_region
      %45 = vsyncadd [#allocation6], 0
      %s46 = sshll.u32 %s2, 4
      %s47 = int_to_ptr.hbm [resolvable:$true] %s46
      %s48 = sshll.u32 [#allocation7], 4
      %s49 = int_to_ptr.vmem [resolvable:$true] %s48
      %54 = dma.hbm_to_vmem [thread:$0]  %s47, 768, %s49, [#allocation6], 256, 256, 16
    $region13: #{tpu_custom_call.1} parent=1 // pred_fallthru
      _
    // Predicated region
    $region14: #{tpu_custom_call.1} parent=1 // pred_check
      _
    $region15: #{tpu_custom_call.1} parent=1 // pred_check_branch
      %56 = sbr.rel (0) target = $region17
    $region16: #{tpu_custom_call.1} parent=1 // pred_region
      %58 = vsyncadd [#allocation9], 0
      %s60 = sshll.u32 %s3, 4
      %s61 = int_to_ptr.hbm [resolvable:$true] %s60
      %s62 = sshll.u32 [#allocation8], 4
      %s63 = int_to_ptr.vmem [resolvable:$true] %s62
      %65 = dma.hbm_to_vmem [thread:$0]  %s61, 64, %s63, [#allocation9]
    $region17: #{tpu_custom_call.1} parent=1 // pred_fallthru
      _
    // Predicated region
    $region18: #{tpu_custom_call.1} parent=1 // pred_check
      _
    $region19: #{tpu_custom_call.1} parent=1 // pred_check_branch
      %67 = sbr.rel (0) target = $region21
    $region20: #{tpu_custom_call.1} parent=1 // pred_region
      %69 = vsyncadd [#allocation9], 0
      %s70 = sshll.u32 %s4, 4
      %s71 = int_to_ptr.hbm [resolvable:$true] %s70
      %s72 = sshll.u32 [#allocation10], 4
      %s73 = int_to_ptr.vmem [resolvable:$true] %s72
      %78 = dma.hbm_to_vmem [thread:$0]  %s71, 8192, %s73, [#allocation9], 128, 128, 8
    $region21: #{tpu_custom_call.1} parent=1 // pred_fallthru
      _
    // Predicated region
    $region22: #{tpu_custom_call.1} parent=1 // pred_check
      _
    $region23: #{tpu_custom_call.1} parent=1 // pred_check_branch
      %80 = sbr.rel (0) target = $region25
    $region24: #{tpu_custom_call.1} parent=1 // pred_region
      _
    $region25: #{tpu_custom_call.1} parent=1 // pred_fallthru
      _
    // Predicated region
    $region26: #{tpu_custom_call.1} parent=1 // pred_check
      _
    $region27: #{tpu_custom_call.1} parent=1 // pred_check_branch
      %82 = sbr.rel (0) target = $region29
    $region28: #{tpu_custom_call.1} parent=1 // pred_region
      %84 = vsyncadd [#allocation12], 0
      %s85 = sshll.u32 %s6, 4
      %s86 = int_to_ptr.hbm [resolvable:$true] %s85
      %s87 = sshll.u32 [#allocation11], 4
      %s88 = int_to_ptr.vmem [resolvable:$true] %s87
      %93 = dma.hbm_to_vmem [thread:$0]  %s86, 2048, %s88, [#allocation12], 64, 64, 4
    $region29: #{tpu_custom_call.1} parent=1 // pred_fallthru
      _
    // Predicated region
    $region30: #{tpu_custom_call.1} parent=1 // pred_check
      _
    $region31: #{tpu_custom_call.1} parent=1 // pred_check_branch
      %95 = sbr.rel (0) target = $region33
    $region32: #{tpu_custom_call.1} parent=1 // pred_region
      _
    $region33: #{tpu_custom_call.1} parent=1 // pred_fallthru
      _
    // Predicated region
    $region34: #{tpu_custom_call.1} parent=1 // pred_check
      _
    $region35: #{tpu_custom_call.1} parent=1 // pred_check_branch
      %97 = sbr.rel (0) target = $region37
    $region36: #{tpu_custom_call.1} parent=1 // pred_region
      %99 = vsyncadd [#allocation12], 0
      %s100 = sshll.u32 %s8, 4
      %s101 = int_to_ptr.hbm [resolvable:$true] %s100
      %s102 = sshll.u32 [#allocation13], 4
      %s103 = int_to_ptr.vmem [resolvable:$true] %s102
      %108 = dma.hbm_to_vmem [thread:$0]  %s101, 1024, %s103, [#allocation12], 64, 64, 4
    $region37: #{tpu_custom_call.1} parent=1 // pred_fallthru
      _
    // Predicated region
    $region38: #{tpu_custom_call.1} parent=1 // pred_check
      _
    $region39: #{tpu_custom_call.1} parent=1 // pred_check_branch
      %110 = sbr.rel (0) target = $region41
    $region40: #{tpu_custom_call.1} parent=1 // pred_region
      _
    $region41: #{tpu_custom_call.1} parent=1 // pred_fallthru
      _
    // Predicated region
    $region42: #{tpu_custom_call.1} parent=1 // pred_check
      _
    $region43: #{tpu_custom_call.1} parent=1 // pred_check_branch
      %112 = sbr.rel (0) target = $region45
    $region44: #{tpu_custom_call.1} parent=1 // pred_region
      %114 = dma.done [#allocation3], 128
    $region45: #{tpu_custom_call.1} parent=1 // pred_fallthru
      _
    // Predicated region
    $region46: #{tpu_custom_call.1} parent=1 // pred_check
      _
    $region47: #{tpu_custom_call.1} parent=1 // pred_check_branch
      %116 = sbr.rel (0) target = $region49
    $region48: #{tpu_custom_call.1} parent=1 // pred_region
      %118 = dma.done [#allocation6], 128
    $region49: #{tpu_custom_call.1} parent=1 // pred_fallthru
      _
    // Predicated region
    $region50: #{tpu_custom_call.1} parent=1 // pred_check
      _
    $region51: #{tpu_custom_call.1} parent=1 // pred_check_branch
      %120 = sbr.rel (0) target = $region53
    $region52: #{tpu_custom_call.1} parent=1 // pred_region
      %122 = dma.done [#allocation6], 768
    $region53: #{tpu_custom_call.1} parent=1 // pred_fallthru
      _
    // Predicated region
    $region54: #{tpu_custom_call.1} parent=1 // pred_check
      _
    $region55: #{tpu_custom_call.1} parent=1 // pred_check_branch
      %124 = sbr.rel (0) target = $region57
    $region56: #{tpu_custom_call.1} parent=1 // pred_region
      %126 = dma.done [#allocation9], 64
    $region57: #{tpu_custom_call.1} parent=1 // pred_fallthru
      _
    // Predicated region
    $region58: #{tpu_custom_call.1} parent=1 // pred_check
      _
    $region59: #{tpu_custom_call.1} parent=1 // pred_check_branch
      %128 = sbr.rel (0) target = $region61
    $region60: #{tpu_custom_call.1} parent=1 // pred_region
      %130 = dma.done [#allocation9], 8192
    $region61: #{tpu_custom_call.1} parent=1 // pred_fallthru
      _
    // Predicated region
    $region62: #{tpu_custom_call.1} parent=1 // pred_check
      _
    $region63: #{tpu_custom_call.1} parent=1 // pred_check_branch
      %132 = sbr.rel (0) target = $region65
    $region64: #{tpu_custom_call.1} parent=1 // pred_region
      %134 = dma.done [#allocation12], 2048
    $region65: #{tpu_custom_call.1} parent=1 // pred_fallthru
      _
    // Predicated region
    $region66: #{tpu_custom_call.1} parent=1 // pred_check
      _
    $region67: #{tpu_custom_call.1} parent=1 // pred_check_branch
      %136 = sbr.rel (0) target = $region69
    $region68: #{tpu_custom_call.1} parent=1 // pred_region
      %138 = dma.done [#allocation12], 1024
    $region69: #{tpu_custom_call.1} parent=1 // pred_fallthru
      _
    %v140 = vld [vmem:[#allocation2] sm:$0xff]
    %v141 = vpack.c.bf16 %v140, %v140
    %v142 = vld [vmem:[#allocation7] sm:$0xff]
    %v143 = vld [vmem:[#allocation7 + $0x8] sm:$0xff]
    %v144 = vld [vmem:[#allocation7 + $0x10] sm:$0xff]
    %v145 = vld [vmem:[#allocation7 + $0x18] sm:$0xff]
    %v146 = vld [vmem:[#allocation7 + $0x20] sm:$0xff]
    %v147 = vld [vmem:[#allocation7 + $0x28] sm:$0xff]
    %v148 = vld [vmem:[#allocation8] sm:$0xf]
    %v150 = vperm.slane %v148, 0
    %v151 = vperm.slane %v148, 1
    %v152 = vperm.slane %v148, 2
    %v153 = vperm.slane %v148, 3
    %v164 = vunpack.c.l.b16 %v142
    %v165 = vunpack.c.h.b16 %v142
    %v166 = vunpack.c.l.b16 %v143
    %v167 = vunpack.c.h.b16 %v143
    %v168 = vunpack.c.l.b16 %v144
    %v169 = vunpack.c.h.b16 %v144
    %v170 = vunpack.c.l.b16 %v145
    %v171 = vunpack.c.h.b16 %v145
    %v172 = vunpack.c.l.b16 %v146
    %v173 = vunpack.c.h.b16 %v146
    %v174 = vunpack.c.l.b16 %v147
    %v175 = vunpack.c.h.b16 %v147
    %v176 = vpack.c.b16 %v168, %v164
    %v177 = vpack.c.b16 %v169, %v165
    %v178 = vpack.c.b16 %v170, %v166
    %v179 = vpack.c.b16 %v171, %v167
    %v180 = vpack.c.b16 %v172, %v172
    %v181 = vpack.c.b16 %v173, %v173
    %v182 = vpack.c.b16 %v174, %v174
    %v183 = vpack.c.b16 %v175, %v175
    %vm188 = vcmask 195584
    %v190 = vsel %vm188, %v141, 0
    %vm192 = vcmask 1043456
    %v194 = vsel %vm192, %v180, 0
    %v197 = vsel %vm192, %v181, 0
    %v200 = vsel %vm192, %v182, 0
    %v203 = vsel %vm192, %v183, 0
    %205 = vmatpush.bf16.msra.mxu0 0
    %206 = vmatpush.bf16.msra.mxu0 0
    %207 = vmatpush.bf16.msra.mxu0 0
    %208 = vmatpush.bf16.msra.mxu0 0
    %209 = vmatpush.bf16.msra.mxu0 0
    %210 = vmatpush.bf16.msra.mxu0 0
    %211 = vmatpush.bf16.msra.mxu0 %v194
    %212 = vmatpush.bf16.msra.mxu0 %v176
    %213 = vmatmul.bf16.gmra.mxu0 %v190
    %v214 = vpop.f32.mrf.mxu0
    %v215 = vadd.f32 %v150, %v214
    %v216 = vpop.f32.mrf.mxu0
    %217 = vdwg.mxu0
    %218 = vmatpush.bf16.msra.mxu0 0
    %219 = vmatpush.bf16.msra.mxu0 0
    %220 = vmatpush.bf16.msra.mxu0 0
    %221 = vmatpush.bf16.msra.mxu0 0
    %222 = vmatpush.bf16.msra.mxu0 0
    %223 = vmatpush.bf16.msra.mxu0 0
    %224 = vmatpush.bf16.msra.mxu0 %v197
    %225 = vmatpush.bf16.msra.mxu0 %v177
    %226 = vmatmul.bf16.gmra.mxu0 %v190
    %v227 = vpop.f32.mrf.mxu0
    %v228 = vadd.f32 %v151, %v227
    %v229 = vpop.f32.mrf.mxu0
    %230 = vdwg.mxu0
    %231 = vmatpush.bf16.msra.mxu0 0
    %232 = vmatpush.bf16.msra.mxu0 0
    %233 = vmatpush.bf16.msra.mxu0 0
    %234 = vmatpush.bf16.msra.mxu0 0
    %235 = vmatpush.bf16.msra.mxu0 0
    %236 = vmatpush.bf16.msra.mxu0 0
    %237 = vmatpush.bf16.msra.mxu0 %v200
    %238 = vmatpush.bf16.msra.mxu0 %v178
    %239 = vmatmul.bf16.gmra.mxu0 %v190
    %v240 = vpop.f32.mrf.mxu0
    %v241 = vadd.f32 %v152, %v240
    %v242 = vpop.f32.mrf.mxu0
    %243 = vdwg.mxu0
    %244 = vmatpush.bf16.msra.mxu0 0
    %245 = vmatpush.bf16.msra.mxu0 0
    %246 = vmatpush.bf16.msra.mxu0 0
    %247 = vmatpush.bf16.msra.mxu0 0
    %248 = vmatpush.bf16.msra.mxu0 0
    %249 = vmatpush.bf16.msra.mxu0 0
    %250 = vmatpush.bf16.msra.mxu0 %v203
    %251 = vmatpush.bf16.msra.mxu0 %v179
    %252 = vmatmul.bf16.gmra.mxu0 %v190
    %v253 = vpop.f32.mrf.mxu0
    %v254 = vadd.f32 %v153, %v253
    %v255 = vpop.f32.mrf.mxu0
    %256 = vdwg.mxu0
    %v257 = vmax.f32 %v215, 0.0
    %v258 = vmax.f32 %v228, 0.0
    %v259 = vmax.f32 %v241, 0.0
    %v260 = vmax.f32 %v254, 0.0
    %v261 = vpack.c.bf16 %v257, %v257
    %v262 = vpack.c.bf16 %v258, %v258
    %v263 = vpack.c.bf16 %v259, %v259
    %v264 = vpack.c.bf16 %v260, %v260
    %v265 = vld [vmem:[#allocation10] sm:$0xff]
    %v266 = vld [vmem:[#allocation10 + $0x8] sm:$0xff]
    %v267 = vld [vmem:[#allocation10 + $0x10] sm:$0xff]
    %v268 = vld [vmem:[#allocation10 + $0x18] sm:$0xff]
    %v269 = vld [vmem:[#allocation10 + $0x20] sm:$0xff]
    %v270 = vld [vmem:[#allocation10 + $0x28] sm:$0xff]
    %v271 = vld [vmem:[#allocation10 + $0x30] sm:$0xff]
    %v272 = vld [vmem:[#allocation10 + $0x38] sm:$0xff]
    %v273 = vld [vmem:[#allocation10 + $0x40] sm:$0xff]
    %v274 = vld [vmem:[#allocation10 + $0x48] sm:$0xff]
    %v275 = vld [vmem:[#allocation10 + $0x50] sm:$0xff]
    %v276 = vld [vmem:[#allocation10 + $0x58] sm:$0xff]
    %v277 = vld [vmem:[#allocation10 + $0x60] sm:$0xff]
    %v278 = vld [vmem:[#allocation10 + $0x68] sm:$0xff]
    %v279 = vld [vmem:[#allocation10 + $0x70] sm:$0xff]
    %v280 = vld [vmem:[#allocation10 + $0x78] sm:$0xff]
    %v281 = vld [vmem:[#allocation10 + $0x80] sm:$0xff]
    %v282 = vld [vmem:[#allocation10 + $0x88] sm:$0xff]
    %v283 = vld [vmem:[#allocation10 + $0x90] sm:$0xff]
    %v284 = vld [vmem:[#allocation10 + $0x98] sm:$0xff]
    %v285 = vld [vmem:[#allocation10 + $0xa0] sm:$0xff]
    %v286 = vld [vmem:[#allocation10 + $0xa8] sm:$0xff]
    %v287 = vld [vmem:[#allocation10 + $0xb0] sm:$0xff]
    %v288 = vld [vmem:[#allocation10 + $0xb8] sm:$0xff]
    %v289 = vld [vmem:[#allocation10 + $0xc0] sm:$0xff]
    %v290 = vld [vmem:[#allocation10 + $0xc8] sm:$0xff]
    %v291 = vld [vmem:[#allocation10 + $0xd0] sm:$0xff]
    %v292 = vld [vmem:[#allocation10 + $0xd8] sm:$0xff]
    %v293 = vld [vmem:[#allocation10 + $0xe0] sm:$0xff]
    %v294 = vld [vmem:[#allocation10 + $0xe8] sm:$0xff]
    %v295 = vld [vmem:[#allocation10 + $0xf0] sm:$0xff]
    %v296 = vld [vmem:[#allocation10 + $0xf8] sm:$0xff]
    %v297 = vld [vmem:[#allocation10 + $0x100] sm:$0xff]
    %v298 = vld [vmem:[#allocation10 + $0x108] sm:$0xff]
    %v299 = vld [vmem:[#allocation10 + $0x110] sm:$0xff]
    %v300 = vld [vmem:[#allocation10 + $0x118] sm:$0xff]
    %v301 = vld [vmem:[#allocation10 + $0x120] sm:$0xff]
    %v302 = vld [vmem:[#allocation10 + $0x128] sm:$0xff]
    %v303 = vld [vmem:[#allocation10 + $0x130] sm:$0xff]
    %v304 = vld [vmem:[#allocation10 + $0x138] sm:$0xff]
    %v305 = vld [vmem:[#allocation10 + $0x140] sm:$0xff]
    %v306 = vld [vmem:[#allocation10 + $0x148] sm:$0xff]
    %v307 = vld [vmem:[#allocation10 + $0x150] sm:$0xff]
    %v308 = vld [vmem:[#allocation10 + $0x158] sm:$0xff]
    %v309 = vld [vmem:[#allocation10 + $0x160] sm:$0xff]
    %v310 = vld [vmem:[#allocation10 + $0x168] sm:$0xff]
    %v311 = vld [vmem:[#allocation10 + $0x170] sm:$0xff]
    %v312 = vld [vmem:[#allocation10 + $0x178] sm:$0xff]
    %v313 = vld [vmem:[#allocation10 + $0x180] sm:$0xff]
    %v314 = vld [vmem:[#allocation10 + $0x188] sm:$0xff]
    %v315 = vld [vmem:[#allocation10 + $0x190] sm:$0xff]
    %v316 = vld [vmem:[#allocation10 + $0x198] sm:$0xff]
    %v317 = vld [vmem:[#allocation10 + $0x1a0] sm:$0xff]
    %v318 = vld [vmem:[#allocation10 + $0x1a8] sm:$0xff]
    %v319 = vld [vmem:[#allocation10 + $0x1b0] sm:$0xff]
    %v320 = vld [vmem:[#allocation10 + $0x1b8] sm:$0xff]
    %v321 = vld [vmem:[#allocation10 + $0x1c0] sm:$0xff]
    %v322 = vld [vmem:[#allocation10 + $0x1c8] sm:$0xff]
    %v323 = vld [vmem:[#allocation10 + $0x1d0] sm:$0xff]
    %v324 = vld [vmem:[#allocation10 + $0x1d8] sm:$0xff]
    %v325 = vld [vmem:[#allocation10 + $0x1e0] sm:$0xff]
    %v326 = vld [vmem:[#allocation10 + $0x1e8] sm:$0xff]
    %v327 = vld [vmem:[#allocation10 + $0x1f0] sm:$0xff]
    %v328 = vld [vmem:[#allocation10 + $0x1f8] sm:$0xff]
    %v329 = vld [vmem:[%s5] sm:$0x3]
    %v331 = vperm.slane %v329, 0
    %v332 = vperm.slane %v329, 1
    %v399 = vunpack.c.l.b16 %v265
    %v400 = vunpack.c.h.b16 %v265
    %v401 = vunpack.c.l.b16 %v266
    %v402 = vunpack.c.h.b16 %v266
    %v403 = vunpack.c.l.b16 %v267
    %v404 = vunpack.c.h.b16 %v267
    %v405 = vunpack.c.l.b16 %v268
    %v406 = vunpack.c.h.b16 %v268
    %v407 = vunpack.c.l.b16 %v269
    %v408 = vunpack.c.h.b16 %v269
    %v409 = vunpack.c.l.b16 %v270
    %v410 = vunpack.c.h.b16 %v270
    %v411 = vunpack.c.l.b16 %v271
    %v412 = vunpack.c.h.b16 %v271
    %v413 = vunpack.c.l.b16 %v272
    %v414 = vunpack.c.h.b16 %v272
    %v415 = vunpack.c.l.b16 %v273
    %v416 = vunpack.c.h.b16 %v273
    %v417 = vunpack.c.l.b16 %v274
    %v418 = vunpack.c.h.b16 %v274
    %v419 = vunpack.c.l.b16 %v275
    %v420 = vunpack.c.h.b16 %v275
    %v421 = vunpack.c.l.b16 %v276
    %v422 = vunpack.c.h.b16 %v276
    %v423 = vunpack.c.l.b16 %v277
    %v424 = vunpack.c.h.b16 %v277
    %v425 = vunpack.c.l.b16 %v278
    %v426 = vunpack.c.h.b16 %v278
    %v427 = vunpack.c.l.b16 %v279
    %v428 = vunpack.c.h.b16 %v279
    %v429 = vunpack.c.l.b16 %v280
    %v430 = vunpack.c.h.b16 %v280
    %v431 = vunpack.c.l.b16 %v281
    %v432 = vunpack.c.h.b16 %v281
    %v433 = vunpack.c.l.b16 %v282
    %v434 = vunpack.c.h.b16 %v282
    %v435 = vunpack.c.l.b16 %v283
    %v436 = vunpack.c.h.b16 %v283
    %v437 = vunpack.c.l.b16 %v284
    %v438 = vunpack.c.h.b16 %v284
    %v439 = vunpack.c.l.b16 %v285
    %v440 = vunpack.c.h.b16 %v285
    %v441 = vunpack.c.l.b16 %v286
    %v442 = vunpack.c.h.b16 %v286
    %v443 = vunpack.c.l.b16 %v287
    %v444 = vunpack.c.h.b16 %v287
    %v445 = vunpack.c.l.b16 %v288
    %v446 = vunpack.c.h.b16 %v288
    %v447 = vunpack.c.l.b16 %v289
    %v448 = vunpack.c.h.b16 %v289
    %v449 = vunpack.c.l.b16 %v290
    %v450 = vunpack.c.h.b16 %v290
    %v451 = vunpack.c.l.b16 %v291
    %v452 = vunpack.c.h.b16 %v291
    %v453 = vunpack.c.l.b16 %v292
    %v454 = vunpack.c.h.b16 %v292
    %v455 = vunpack.c.l.b16 %v293
    %v456 = vunpack.c.h.b16 %v293
    %v457 = vunpack.c.l.b16 %v294
    %v458 = vunpack.c.h.b16 %v294
    %v459 = vunpack.c.l.b16 %v295
    %v460 = vunpack.c.h.b16 %v295
    %v461 = vunpack.c.l.b16 %v296
    %v462 = vunpack.c.h.b16 %v296
    %v463 = vunpack.c.l.b16 %v297
    %v464 = vunpack.c.h.b16 %v297
    %v465 = vunpack.c.l.b16 %v298
    %v466 = vunpack.c.h.b16 %v298
    %v467 = vunpack.c.l.b16 %v299
    %v468 = vunpack.c.h.b16 %v299
    %v469 = vunpack.c.l.b16 %v300
    %v470 = vunpack.c.h.b16 %v300
    %v471 = vunpack.c.l.b16 %v301
    %v472 = vunpack.c.h.b16 %v301
    %v473 = vunpack.c.l.b16 %v302
    %v474 = vunpack.c.h.b16 %v302
    %v475 = vunpack.c.l.b16 %v303
    %v476 = vunpack.c.h.b16 %v303
    %v477 = vunpack.c.l.b16 %v304
    %v478 = vunpack.c.h.b16 %v304
    %v479 = vunpack.c.l.b16 %v305
    %v480 = vunpack.c.h.b16 %v305
    %v481 = vunpack.c.l.b16 %v306
    %v482 = vunpack.c.h.b16 %v306
    %v483 = vunpack.c.l.b16 %v307
    %v484 = vunpack.c.h.b16 %v307
    %v485 = vunpack.c.l.b16 %v308
    %v486 = vunpack.c.h.b16 %v308
    %v487 = vunpack.c.l.b16 %v309
    %v488 = vunpack.c.h.b16 %v309
    %v489 = vunpack.c.l.b16 %v310
    %v490 = vunpack.c.h.b16 %v310
    %v491 = vunpack.c.l.b16 %v311
    %v492 = vunpack.c.h.b16 %v311
    %v493 = vunpack.c.l.b16 %v312
    %v494 = vunpack.c.h.b16 %v312
    %v495 = vunpack.c.l.b16 %v313
    %v496 = vunpack.c.h.b16 %v313
    %v497 = vunpack.c.l.b16 %v314
    %v498 = vunpack.c.h.b16 %v314
    %v499 = vunpack.c.l.b16 %v315
    %v500 = vunpack.c.h.b16 %v315
    %v501 = vunpack.c.l.b16 %v316
    %v502 = vunpack.c.h.b16 %v316
    %v503 = vunpack.c.l.b16 %v317
    %v504 = vunpack.c.h.b16 %v317
    %v505 = vunpack.c.l.b16 %v318
    %v506 = vunpack.c.h.b16 %v318
    %v507 = vunpack.c.l.b16 %v319
    %v508 = vunpack.c.h.b16 %v319
    %v509 = vunpack.c.l.b16 %v320
    %v510 = vunpack.c.h.b16 %v320
    %v511 = vunpack.c.l.b16 %v321
    %v512 = vunpack.c.h.b16 %v321
    %v513 = vunpack.c.l.b16 %v322
    %v514 = vunpack.c.h.b16 %v322
    %v515 = vunpack.c.l.b16 %v323
    %v516 = vunpack.c.h.b16 %v323
    %v517 = vunpack.c.l.b16 %v324
    %v518 = vunpack.c.h.b16 %v324
    %v519 = vunpack.c.l.b16 %v325
    %v520 = vunpack.c.h.b16 %v325
    %v521 = vunpack.c.l.b16 %v326
    %v522 = vunpack.c.h.b16 %v326
    %v523 = vunpack.c.l.b16 %v327
    %v524 = vunpack.c.h.b16 %v327
    %v525 = vunpack.c.l.b16 %v328
    %v526 = vunpack.c.h.b16 %v328
    %v527 = vpack.c.b16 %v401, %v399
    %v528 = vpack.c.b16 %v402, %v400
    %v529 = vpack.c.b16 %v405, %v403
    %v530 = vpack.c.b16 %v406, %v404
    %v531 = vpack.c.b16 %v409, %v407
    %v532 = vpack.c.b16 %v410, %v408
    %v533 = vpack.c.b16 %v413, %v411
    %v534 = vpack.c.b16 %v414, %v412
    %v535 = vpack.c.b16 %v417, %v415
    %v536 = vpack.c.b16 %v418, %v416
    %v537 = vpack.c.b16 %v421, %v419
    %v538 = vpack.c.b16 %v422, %v420
    %v539 = vpack.c.b16 %v425, %v423
    %v540 = vpack.c.b16 %v426, %v424
    %v541 = vpack.c.b16 %v429, %v427
    %v542 = vpack.c.b16 %v430, %v428
    %v543 = vpack.c.b16 %v433, %v431
    %v544 = vpack.c.b16 %v434, %v432
    %v545 = vpack.c.b16 %v437, %v435
    %v546 = vpack.c.b16 %v438, %v436
    %v547 = vpack.c.b16 %v441, %v439
    %v548 = vpack.c.b16 %v442, %v440
    %v549 = vpack.c.b16 %v445, %v443
    %v550 = vpack.c.b16 %v446, %v444
    %v551 = vpack.c.b16 %v449, %v447
    %v552 = vpack.c.b16 %v450, %v448
    %v553 = vpack.c.b16 %v453, %v451
    %v554 = vpack.c.b16 %v454, %v452
    %v555 = vpack.c.b16 %v457, %v455
    %v556 = vpack.c.b16 %v458, %v456
    %v557 = vpack.c.b16 %v461, %v459
    %v558 = vpack.c.b16 %v462, %v460
    %v559 = vpack.c.b16 %v465, %v463
    %v560 = vpack.c.b16 %v466, %v464
    %v561 = vpack.c.b16 %v469, %v467
    %v562 = vpack.c.b16 %v470, %v468
    %v563 = vpack.c.b16 %v473, %v471
    %v564 = vpack.c.b16 %v474, %v472
    %v565 = vpack.c.b16 %v477, %v475
    %v566 = vpack.c.b16 %v478, %v476
    %v567 = vpack.c.b16 %v481, %v479
    %v568 = vpack.c.b16 %v482, %v480
    %v569 = vpack.c.b16 %v485, %v483
    %v570 = vpack.c.b16 %v486, %v484
    %v571 = vpack.c.b16 %v489, %v487
    %v572 = vpack.c.b16 %v490, %v488
    %v573 = vpack.c.b16 %v493, %v491
    %v574 = vpack.c.b16 %v494, %v492
    %v575 = vpack.c.b16 %v497, %v495
    %v576 = vpack.c.b16 %v498, %v496
    %v577 = vpack.c.b16 %v501, %v499
    %v578 = vpack.c.b16 %v502, %v500
    %v579 = vpack.c.b16 %v505, %v503
    %v580 = vpack.c.b16 %v506, %v504
    %v581 = vpack.c.b16 %v509, %v507
    %v582 = vpack.c.b16 %v510, %v508
    %v583 = vpack.c.b16 %v513, %v511
    %v584 = vpack.c.b16 %v514, %v512
    %v585 = vpack.c.b16 %v517, %v515
    %v586 = vpack.c.b16 %v518, %v516
    %v587 = vpack.c.b16 %v521, %v519
    %v588 = vpack.c.b16 %v522, %v520
    %v589 = vpack.c.b16 %v525, %v523
    %v590 = vpack.c.b16 %v526, %v524
    %655 = vmatpush.bf16.msra.mxu0 %v541
    %656 = vmatpush.bf16.msra.mxu0 %v539
    %657 = vmatpush.bf16.msra.mxu0 %v537
    %658 = vmatpush.bf16.msra.mxu0 %v535
    %659 = vmatpush.bf16.msra.mxu0 %v533
    %660 = vmatpush.bf16.msra.mxu0 %v531
    %661 = vmatpush.bf16.msra.mxu0 %v529
    %662 = vmatpush.bf16.msra.mxu0 %v527
    %663 = vmatmul.bf16.gmra.mxu0 %v261
    %v664 = vpop.f32.mrf.mxu0
    %v665 = vadd.f32 %v331, %v664
    %v666 = vpop.f32.mrf.mxu0
    %667 = vdwg.mxu0
    %668 = vmatpush.bf16.msra.mxu0 %v557
    %669 = vmatpush.bf16.msra.mxu0 %v555
    %670 = vmatpush.bf16.msra.mxu0 %v553
    %671 = vmatpush.bf16.msra.mxu0 %v551
    %672 = vmatpush.bf16.msra.mxu0 %v549
    %673 = vmatpush.bf16.msra.mxu0 %v547
    %674 = vmatpush.bf16.msra.mxu0 %v545
    %675 = vmatpush.bf16.msra.mxu0 %v543
    %676 = vmatmul.bf16.gmra.mxu0 %v262
    %v677 = vpop.f32.mrf.mxu0
    %v678 = vadd.f32 %v665, %v677
    %v679 = vpop.f32.mrf.mxu0
    %680 = vdwg.mxu0
    %681 = vmatpush.bf16.msra.mxu0 %v573
    %682 = vmatpush.bf16.msra.mxu0 %v571
    %683 = vmatpush.bf16.msra.mxu0 %v569
    %684 = vmatpush.bf16.msra.mxu0 %v567
    %685 = vmatpush.bf16.msra.mxu0 %v565
    %686 = vmatpush.bf16.msra.mxu0 %v563
    %687 = vmatpush.bf16.msra.mxu0 %v561
    %688 = vmatpush.bf16.msra.mxu0 %v559
    %689 = vmatmul.bf16.gmra.mxu0 %v263
    %v690 = vpop.f32.mrf.mxu0
    %v691 = vadd.f32 %v678, %v690
    %v692 = vpop.f32.mrf.mxu0
    %693 = vdwg.mxu0
    %694 = vmatpush.bf16.msra.mxu0 %v589
    %695 = vmatpush.bf16.msra.mxu0 %v587
    %696 = vmatpush.bf16.msra.mxu0 %v585
    %697 = vmatpush.bf16.msra.mxu0 %v583
    %698 = vmatpush.bf16.msra.mxu0 %v581
    %699 = vmatpush.bf16.msra.mxu0 %v579
    %700 = vmatpush.bf16.msra.mxu0 %v577
    %701 = vmatpush.bf16.msra.mxu0 %v575
    %702 = vmatmul.bf16.gmra.mxu0 %v264
    %v703 = vpop.f32.mrf.mxu0
    %v704 = vadd.f32 %v691, %v703
    %v705 = vpop.f32.mrf.mxu0
    %706 = vdwg.mxu0
    %707 = vmatpush.bf16.msra.mxu0 %v542
    %708 = vmatpush.bf16.msra.mxu0 %v540
    %709 = vmatpush.bf16.msra.mxu0 %v538
    %710 = vmatpush.bf16.msra.mxu0 %v536
    %711 = vmatpush.bf16.msra.mxu0 %v534
    %712 = vmatpush.bf16.msra.mxu0 %v532
    %713 = vmatpush.bf16.msra.mxu0 %v530
    %714 = vmatpush.bf16.msra.mxu0 %v528
    %715 = vmatmul.bf16.gmra.mxu0 %v261
    %v716 = vpop.f32.mrf.mxu0
    %v717 = vadd.f32 %v332, %v716
    %v718 = vpop.f32.mrf.mxu0
    %719 = vdwg.mxu0
    %720 = vmatpush.bf16.msra.mxu0 %v558
    %721 = vmatpush.bf16.msra.mxu0 %v556
    %722 = vmatpush.bf16.msra.mxu0 %v554
    %723 = vmatpush.bf16.msra.mxu0 %v552
    %724 = vmatpush.bf16.msra.mxu0 %v550
    %725 = vmatpush.bf16.msra.mxu0 %v548
    %726 = vmatpush.bf16.msra.mxu0 %v546
    %727 = vmatpush.bf16.msra.mxu0 %v544
    %728 = vmatmul.bf16.gmra.mxu0 %v262
    %v729 = vpop.f32.mrf.mxu0
    %v730 = vadd.f32 %v717, %v729
    %v731 = vpop.f32.mrf.mxu0
    %732 = vdwg.mxu0
    %733 = vmatpush.bf16.msra.mxu0 %v574
    %734 = vmatpush.bf16.msra.mxu0 %v572
    %735 = vmatpush.bf16.msra.mxu0 %v570
    %736 = vmatpush.bf16.msra.mxu0 %v568
    %737 = vmatpush.bf16.msra.mxu0 %v566
    %738 = vmatpush.bf16.msra.mxu0 %v564
    %739 = vmatpush.bf16.msra.mxu0 %v562
    %740 = vmatpush.bf16.msra.mxu0 %v560
    %741 = vmatmul.bf16.gmra.mxu0 %v263
    %v742 = vpop.f32.mrf.mxu0
    %v743 = vadd.f32 %v730, %v742
    %v744 = vpop.f32.mrf.mxu0
    %745 = vdwg.mxu0
    %746 = vmatpush.bf16.msra.mxu0 %v590
    %747 = vmatpush.bf16.msra.mxu0 %v588
    %748 = vmatpush.bf16.msra.mxu0 %v586
    %749 = vmatpush.bf16.msra.mxu0 %v584
    %750 = vmatpush.bf16.msra.mxu0 %v582
    %751 = vmatpush.bf16.msra.mxu0 %v580
    %752 = vmatpush.bf16.msra.mxu0 %v578
    %753 = vmatpush.bf16.msra.mxu0 %v576
    %754 = vmatmul.bf16.gmra.mxu0 %v264
    %v755 = vpop.f32.mrf.mxu0
    %v756 = vadd.f32 %v743, %v755
    %v757 = vpop.f32.mrf.mxu0
    %758 = vdwg.mxu0
    %v759 = vmax.f32 %v704, 0.0
    %v760 = vmax.f32 %v756, 0.0
    %v761 = vpack.c.bf16 %v759, %v759
    %v762 = vpack.c.bf16 %v760, %v760
    %v763 = vld [vmem:[#allocation11] sm:$0xf]
    %v764 = vld [vmem:[#allocation11 + $0x4] sm:$0xf]
    %v765 = vld [vmem:[#allocation11 + $0x8] sm:$0xf]
    %v766 = vld [vmem:[#allocation11 + $0xc] sm:$0xf]
    %v767 = vld [vmem:[#allocation11 + $0x10] sm:$0xf]
    %v768 = vld [vmem:[#allocation11 + $0x14] sm:$0xf]
    %v769 = vld [vmem:[#allocation11 + $0x18] sm:$0xf]
    %v770 = vld [vmem:[#allocation11 + $0x1c] sm:$0xf]
    %v771 = vld [vmem:[#allocation11 + $0x20] sm:$0xf]
    %v772 = vld [vmem:[#allocation11 + $0x24] sm:$0xf]
    %v773 = vld [vmem:[#allocation11 + $0x28] sm:$0xf]
    %v774 = vld [vmem:[#allocation11 + $0x2c] sm:$0xf]
    %v775 = vld [vmem:[#allocation11 + $0x30] sm:$0xf]
    %v776 = vld [vmem:[#allocation11 + $0x34] sm:$0xf]
    %v777 = vld [vmem:[#allocation11 + $0x38] sm:$0xf]
    %v778 = vld [vmem:[#allocation11 + $0x3c] sm:$0xf]
    %v779 = vld [vmem:[#allocation11 + $0x40] sm:$0xf]
    %v780 = vld [vmem:[#allocation11 + $0x44] sm:$0xf]
    %v781 = vld [vmem:[#allocation11 + $0x48] sm:$0xf]
    %v782 = vld [vmem:[#allocation11 + $0x4c] sm:$0xf]
    %v783 = vld [vmem:[#allocation11 + $0x50] sm:$0xf]
    %v784 = vld [vmem:[#allocation11 + $0x54] sm:$0xf]
    %v785 = vld [vmem:[#allocation11 + $0x58] sm:$0xf]
    %v786 = vld [vmem:[#allocation11 + $0x5c] sm:$0xf]
    %v787 = vld [vmem:[#allocation11 + $0x60] sm:$0xf]
    %v788 = vld [vmem:[#allocation11 + $0x64] sm:$0xf]
    %v789 = vld [vmem:[#allocation11 + $0x68] sm:$0xf]
    %v790 = vld [vmem:[#allocation11 + $0x6c] sm:$0xf]
    %v791 = vld [vmem:[#allocation11 + $0x70] sm:$0xf]
    %v792 = vld [vmem:[#allocation11 + $0x74] sm:$0xf]
    %v793 = vld [vmem:[#allocation11 + $0x78] sm:$0xf]
    %v794 = vld [vmem:[#allocation11 + $0x7c] sm:$0xf]
    %v795 = vld [vmem:[%s7] sm:$0x1]
    %v797 = vperm.slane %v795, 0
    %v831 = vunpack.c.l.b16 %v763
    %v832 = vunpack.c.l.b16 %v764
    %v833 = vunpack.c.l.b16 %v765
    %v834 = vunpack.c.l.b16 %v766
    %v835 = vunpack.c.l.b16 %v767
    %v836 = vunpack.c.l.b16 %v768
    %v837 = vunpack.c.l.b16 %v769
    %v838 = vunpack.c.l.b16 %v770
    %v839 = vunpack.c.l.b16 %v771
    %v840 = vunpack.c.l.b16 %v772
    %v841 = vunpack.c.l.b16 %v773
    %v842 = vunpack.c.l.b16 %v774
    %v843 = vunpack.c.l.b16 %v775
    %v844 = vunpack.c.l.b16 %v776
    %v845 = vunpack.c.l.b16 %v777
    %v846 = vunpack.c.l.b16 %v778
    %v847 = vunpack.c.l.b16 %v779
    %v848 = vunpack.c.l.b16 %v780
    %v849 = vunpack.c.l.b16 %v781
    %v850 = vunpack.c.l.b16 %v782
    %v851 = vunpack.c.l.b16 %v783
    %v852 = vunpack.c.l.b16 %v784
    %v853 = vunpack.c.l.b16 %v785
    %v854 = vunpack.c.l.b16 %v786
    %v855 = vunpack.c.l.b16 %v787
    %v856 = vunpack.c.l.b16 %v788
    %v857 = vunpack.c.l.b16 %v789
    %v858 = vunpack.c.l.b16 %v790
    %v859 = vunpack.c.l.b16 %v791
    %v860 = vunpack.c.l.b16 %v792
    %v861 = vunpack.c.l.b16 %v793
    %v862 = vunpack.c.l.b16 %v794
    %v863 = vpack.c.b16 %v832, %v831
    %v864 = vpack.c.b16 %v834, %v833
    %v865 = vpack.c.b16 %v836, %v835
    %v866 = vpack.c.b16 %v838, %v837
    %v867 = vpack.c.b16 %v840, %v839
    %v868 = vpack.c.b16 %v842, %v841
    %v869 = vpack.c.b16 %v844, %v843
    %v870 = vpack.c.b16 %v846, %v845
    %v871 = vpack.c.b16 %v848, %v847
    %v872 = vpack.c.b16 %v850, %v849
    %v873 = vpack.c.b16 %v852, %v851
    %v874 = vpack.c.b16 %v854, %v853
    %v875 = vpack.c.b16 %v856, %v855
    %v876 = vpack.c.b16 %v858, %v857
    %v877 = vpack.c.b16 %v860, %v859
    %v878 = vpack.c.b16 %v862, %v861
    %895 = vmatpush.bf16.msra.mxu0 %v870
    %896 = vmatpush.bf16.msra.mxu0 %v869
    %897 = vmatpush.bf16.msra.mxu0 %v868
    %898 = vmatpush.bf16.msra.mxu0 %v867
    %899 = vmatpush.bf16.msra.mxu0 %v866
    %900 = vmatpush.bf16.msra.mxu0 %v865
    %901 = vmatpush.bf16.msra.mxu0 %v864
    %902 = vmatpush.bf16.msra.mxu0 %v863
    %903 = vmatmul.bf16.gmra.mxu0 %v761
    %v904 = vpop.f32.mrf.mxu0
    %v905 = vadd.f32 %v797, %v904
    %v906 = vpop.f32.mrf.mxu0
    %907 = vdwg.mxu0
    %908 = vmatpush.bf16.msra.mxu0 %v878
    %909 = vmatpush.bf16.msra.mxu0 %v877
    %910 = vmatpush.bf16.msra.mxu0 %v876
    %911 = vmatpush.bf16.msra.mxu0 %v875
    %912 = vmatpush.bf16.msra.mxu0 %v874
    %913 = vmatpush.bf16.msra.mxu0 %v873
    %914 = vmatpush.bf16.msra.mxu0 %v872
    %915 = vmatpush.bf16.msra.mxu0 %v871
    %916 = vmatmul.bf16.gmra.mxu0 %v762
    %v917 = vpop.f32.mrf.mxu0
    %v918 = vadd.f32 %v905, %v917
    %v919 = vpop.f32.mrf.mxu0
    %920 = vdwg.mxu0
    %v921 = vmax.f32 %v918, 0.0
    %v922 = vpack.c.bf16 %v921, %v921
    %v923 = vld [vmem:[#allocation13] sm:$0xf]
    %v924 = vld [vmem:[#allocation13 + $0x4] sm:$0xf]
    %v925 = vld [vmem:[#allocation13 + $0x8] sm:$0xf]
    %v926 = vld [vmem:[#allocation13 + $0xc] sm:$0xf]
    %v927 = vld [vmem:[#allocation13 + $0x10] sm:$0xf]
    %v928 = vld [vmem:[#allocation13 + $0x14] sm:$0xf]
    %v929 = vld [vmem:[#allocation13 + $0x18] sm:$0xf]
    %v930 = vld [vmem:[#allocation13 + $0x1c] sm:$0xf]
    %v931 = vld [vmem:[#allocation13 + $0x20] sm:$0xf]
    %v932 = vld [vmem:[#allocation13 + $0x24] sm:$0xf]
    %v933 = vld [vmem:[#allocation13 + $0x28] sm:$0xf]
    %v934 = vld [vmem:[#allocation13 + $0x2c] sm:$0xf]
    %v935 = vld [vmem:[#allocation13 + $0x30] sm:$0xf]
    %v936 = vld [vmem:[#allocation13 + $0x34] sm:$0xf]
    %v937 = vld [vmem:[#allocation13 + $0x38] sm:$0xf]
    %v938 = vld [vmem:[#allocation13 + $0x3c] sm:$0xf]
    %v939 = vld [vmem:[%s9] sm:$0x1]
    %v941 = vperm.slane %v939, 0
    %v959 = vunpack.c.l.b16 %v923
    %v960 = vunpack.c.l.b16 %v924
    %v961 = vunpack.c.l.b16 %v925
    %v962 = vunpack.c.l.b16 %v926
    %v963 = vunpack.c.l.b16 %v927
    %v964 = vunpack.c.l.b16 %v928
    %v965 = vunpack.c.l.b16 %v929
    %v966 = vunpack.c.l.b16 %v930
    %v967 = vunpack.c.l.b16 %v931
    %v968 = vunpack.c.l.b16 %v932
    %v969 = vunpack.c.l.b16 %v933
    %v970 = vunpack.c.l.b16 %v934
    %v971 = vunpack.c.l.b16 %v935
    %v972 = vunpack.c.l.b16 %v936
    %v973 = vunpack.c.l.b16 %v937
    %v974 = vunpack.c.l.b16 %v938
    %v975 = vpack.c.b16 %v960, %v959
    %v976 = vpack.c.b16 %v962, %v961
    %v977 = vpack.c.b16 %v964, %v963
    %v978 = vpack.c.b16 %v966, %v965
    %v979 = vpack.c.b16 %v968, %v967
    %v980 = vpack.c.b16 %v970, %v969
    %v981 = vpack.c.b16 %v972, %v971
    %v982 = vpack.c.b16 %v974, %v973
    %991 = vmatpush.bf16.msra.mxu0 %v982
    %992 = vmatpush.bf16.msra.mxu0 %v981
    %993 = vmatpush.bf16.msra.mxu0 %v980
    %994 = vmatpush.bf16.msra.mxu0 %v979
    %995 = vmatpush.bf16.msra.mxu0 %v978
    %996 = vmatpush.bf16.msra.mxu0 %v977
    %997 = vmatpush.bf16.msra.mxu0 %v976
    %998 = vmatpush.bf16.msra.mxu0 %v975
    %999 = vmatmul.bf16.gmra.mxu0 %v922
    %v1000 = vpop.f32.mrf.mxu0
    %v1001 = vadd.f32 %v941, %v1000
    %v1002 = vpop.f32.mrf.mxu0
    %1003 = vdwg.mxu0
    %v1004 = vld [vmem:[#allocation5] sm:$0xff]
    %v1005 = vmul.f32 %v1004, -0.5
    %v1006 = vmul.f32 %v1005, %v1004
    %v1007 = vlaneseq
    %v1008 = vshrl.u32 %v1007, 7
    %v1009 = vlaneseq
    %v1010 = vand.u32 %v1009, 127
    %v1011 = vadd.s32 %v1008, 64
    %vm1012 = vcmp.eq.s32.totalorder %v1010, %v1011
    %v1013 = vsel %vm1012, 1, 0
    %v1014 = vcvt.s32.f32 %v1013
    %vm1015 = vcmask 64512
    %v1017 = vsel %vm1015, %v1006, 0
    %1019 = vmatpush.msra.mxu0 0.0
    %1020 = vmatpush.msra.mxu0 0.0
    %1021 = vmatpush.msra.mxu0 0.0
    %1022 = vmatpush.msra.mxu0 0.0
    %1023 = vmatpush.msra.mxu0 0.0
    %1024 = vmatpush.msra.mxu0 0.0
    %1025 = vmatpush.msra.mxu0 0.0
    %1026 = vmatpush.msra.mxu0 0.0
    %1027 = vmatpush.msra.mxu0 0.0
    %1028 = vmatpush.msra.mxu0 0.0
    %1029 = vmatpush.msra.mxu0 0.0
    %1030 = vmatpush.msra.mxu0 0.0
    %1031 = vmatpush.msra.mxu0 0.0
    %1032 = vmatpush.msra.mxu0 0.0
    %1033 = vmatpush.msra.mxu0 0.0
    %1034 = vmatpush.msra.mxu0 %v1014
    %1035 = vmatmul.f32.gmra.mxu0 %v1017
    %v1036 = vpop.f32.mrf.mxu0
    %v1037 = vadd.f32 0.0, %v1036
    %1038 = vdwg.mxu0
    %vm1039 = vcmp.eq.s32.totalorder %v1010, 1
    %v1040 = vmul.f32 %v1001, 0.5
    %v1041 = vsel %vm1039, %v1040, %v1001
    %v1042 = vtanh.pop %v1041
    %vm1043 = vcmp.eq.s32.totalorder %v1010, 0
    %v1044 = vadd.f32 %v1042, 1.0
    %v1045 = vmul.f32 %v1044, 0.5
    %v1046 = vsel %vm1043, %v1042, %v1045
    %v1047 = vsel %vm1043, 2.5, 0.22
    %v1048 = vmul.f32 %v1046, %v1047
    %v1049 = vmax.f32 %v1001, 0.0
    %v1050 = vand.u32 2147483647, %v1001
    %v1051 = vsub.f32 0.0, %v1050
    %v1052 = vmul.f32 %v1051, 1.442695
    %v1053 = vpow.pop %v1052
    %v1054 = vadd.f32 %v1053, 1.0
    %v1055 = vlog2.pop %v1054
    %v1056 = vmul.f32 %v1055, 0.6931472
    %v1057 = vmul.f32 -0.5, %v1053
    %v1058 = vadd.f32 %v1057, 1.0
    %v1059 = vmul.f32 %v1058, %v1053
    %v1060 = vand.u32 2147483647, %v1053
    %vm1061 = vcmp.lt.f32.partialorder %v1060, 0.0004427343
    %v1062 = vsel %vm1061, %v1059, %v1056
    %v1063 = vadd.f32 %v1049, %v1062
    %1064 = vrot.lane.b32.xlu0 %v1046, 64
    %v1065 = vpop.permute.xlu0 %1064
    %v1066 = vtanh.pop %v1065
    %v1067 = vlog2.pop %v1063
    %v1068 = vmul.f32 %v1067, 0.6931472
    %v1069 = vsub.f32 %v1037, %v1068
    %v1070 = vsub.f32 %v1069, 0.9189385
    %v1071 = vmul.f32 %v1066, %v1066
    %v1072 = vsub.f32 1.0, %v1071
    %v1073 = vadd.f32 %v1072, 1e-07
    %v1074 = vlog2.pop %v1073
    %v1075 = vmul.f32 %v1074, 0.6931472
    %v1076 = vsub.f32 %v1070, %v1075
    %vm1077 = vcmp.lt.s32.totalorder %v1010, 64
    %v1078 = vsel %vm1077, %v1048, %v1076
    %1079 = vst [vmem:[#allocation14] sm:$0xff] %v1078
    // Predicated region
    $region70: #{tpu_custom_call.1} parent=1 // pred_check
      _
    $region71: #{tpu_custom_call.1} parent=1 // pred_check_branch
      %1081 = sbr.rel (0) target = $region73
    $region72: #{tpu_custom_call.1} parent=1 // pred_region
      %1083 = vsyncadd [#allocation4], 0
      %s1085 = sshll.u32 [#allocation14], 4
      %s1086 = int_to_ptr.vmem [resolvable:$true] %s1085
      %s1087 = sshll.u32 %s10, 4
      %s1088 = int_to_ptr.hbm [resolvable:$true] %s1087
      %1090 = dma.vmem_to_hbm [thread:$0]  %s1086, 128, %s1088, [#allocation4]
    $region73: #{tpu_custom_call.1} parent=1 // pred_fallthru
      _
    // Predicated region
    $region74: #{tpu_custom_call.1} parent=1 // pred_check
      _
    $region75: #{tpu_custom_call.1} parent=1 // pred_check_branch
      %1092 = sbr.rel (0) target = $region77
    $region76: #{tpu_custom_call.1} parent=1 // pred_region
      %1094 = dma.done [#allocation4], 128
    $region77: #{tpu_custom_call.1} parent=1 // pred_fallthru
      _
    %1095 = vsyncpa [#allocation3], 1
    %1096 = vsyncpa [#allocation6], 1
    %1097 = vsyncpa [#allocation9], 1
    %1098 = vsyncpa [#allocation12], 1
    %1099 = vsyncpa [#allocation4], 1

</llo_original>
